<compile_context>
chip_gen: v7x
topology: tpu7x:2x2x1
jax: 0.10.0
libtpu: 0.0.40
codegen_flags: <defaults>
</compile_context>

<pallas_src>
import functools

import jax
import jax.numpy as jnp
from jax.experimental import pallas as pl
from jax.experimental.pallas import tpu as pltpu


def _coordconv_kernel(x_ref, w_in_ref, w_coord_ref, coords_ref, o_ref, *,
                      batch_block):
    """One grid step: out[b] = W_in @ x[b] + (W_coord_aug @ coords_aug)."""
    # Batch-invariant coordinate + bias contribution: (O, 8) @ (8, HW_BLK).
    cmap = jnp.dot(w_coord_ref[...], coords_ref[...],
                   preferred_element_type=jnp.float32)          # (O, HW_BLK) f32
    w = w_in_ref[...]                                           # (O, C) f32, resident
    for b in range(batch_block):        # static unroll: back-to-back MXU pushes
        xb = x_ref[b].astype(jnp.float32)                       # (C, HW_BLK)
        acc = jnp.dot(w, xb, preferred_element_type=jnp.float32)
        o_ref[b] = (acc + cmap).astype(o_ref.dtype)


def coordconv_forward(x, weight, bias, *, hw_block=2048, batch_block=None):
    """CoordConv forward pass.

    x: (B, C, H, W) NCHW; weight: (O, C+2); bias: (O,).  Returns (B, O, H, W).
    Requires H > 1 and W > 1 (coordinate normalization divides by H-1 / W-1,
    matching the PyTorch module).
    """
    B, C, H, W = x.shape
    O = weight.shape[0]
    HW = H * W
    out_dtype = x.dtype

    w32 = weight.astype(jnp.float32)
    b32 = bias.astype(jnp.float32)

    # --- tiny batch-invariant operands -----------------------------------------
    # coords_aug rows: [xx (varies along H), yy (varies along W), ones (bias),
    # 5 zero rows] -> (8, HW) so the MXU contraction is sublane-aligned.
    rows = jnp.arange(H, dtype=jnp.float32)[:, None]
    cols = jnp.arange(W, dtype=jnp.float32)[None, :]
    xx = jnp.broadcast_to(rows / (H - 1) * 2.0 - 1.0, (H, W)).reshape(1, HW)
    yy = jnp.broadcast_to(cols / (W - 1) * 2.0 - 1.0, (H, W)).reshape(1, HW)
    coords_aug = jnp.concatenate(
        [xx, yy, jnp.ones((1, HW), jnp.float32),
         jnp.zeros((5, HW), jnp.float32)], axis=0)                   # (8, HW)

    w_in = w32[:, :C]                                                # (O, C)
    w_coord = jnp.concatenate(
        [w32[:, C:C + 2], b32[:, None], jnp.zeros((O, 5), jnp.float32)],
        axis=1)                                                      # (O, 8)

    # --- tiling ----------------------------------------------------------------
    # Lane-dense spatial blocks: either the full extent or a multiple of 128.
    if HW <= hw_block:
        hw_blk = HW
    else:
        hw_blk = (hw_block // 128) * 128
    n_hw = pl.cdiv(HW, hw_blk)

    if batch_block is None:
        # Pack batch elements per step until each step has >= ~1024 lane columns.
        batch_block = max(1, min(8, -(-1024 // hw_blk)))
    batch_block = min(batch_block, B)
    n_b = pl.cdiv(B, batch_block)

    x2 = x.reshape(B, C, HW)    # contiguous view; no dtype cast / extra HBM pass

    kernel = functools.partial(_coordconv_kernel, batch_block=batch_block)

    # Grid: (hw tiles, batch tiles).  Batch innermost -> the coords tile and the
    # resident weights are not re-fetched across batch steps.  No cross-step
    # state, so both dims are "parallel" (megacore-safe).
    out = pl.pallas_call(
        kernel,
        out_shape=jax.ShapeDtypeStruct((B, O, HW), out_dtype),
        grid_spec=pltpu.PrefetchScalarGridSpec(
            num_scalar_prefetch=0,
            grid=(n_hw, n_b),
            in_specs=[
                pl.BlockSpec((batch_block, C, hw_blk), lambda j, b: (b, 0, j)),
                pl.BlockSpec((O, C), lambda j, b: (0, 0)),       # resident weight
                pl.BlockSpec((O, 8), lambda j, b: (0, 0)),       # coord weight + bias
                pl.BlockSpec((8, hw_blk), lambda j, b: (0, j)),  # coords (+ones)
            ],
            out_specs=pl.BlockSpec((batch_block, O, hw_blk),
                                   lambda j, b: (b, 0, j)),
        ),
        compiler_params=pltpu.CompilerParams(
            dimension_semantics=("parallel", "parallel")),
    )(x2, w_in, w_coord, coords_aug)

    return out.reshape(B, O, H, W)


def _reference(x, weight, bias):
    """Pure-JAX reference reproducing the PyTorch forward exactly."""
    B, C, H, W = x.shape
    yy_idx = jnp.arange(H, dtype=jnp.float32)[:, None]     # rows
    xx_idx = jnp.arange(W, dtype=jnp.float32)[None, :]     # cols
    xx_channel = jnp.broadcast_to(yy_idx, (H, W)) / (H - 1) * 2.0 - 1.0
    yy_channel = jnp.broadcast_to(xx_idx, (H, W)) / (W - 1) * 2.0 - 1.0
    xx_channel = jnp.broadcast_to(xx_channel[None, None], (B, 1, H, W))
    yy_channel = jnp.broadcast_to(yy_channel[None, None], (B, 1, H, W))
    aug = jnp.concatenate([x, xx_channel, yy_channel], axis=1)      # (B, C+2, H, W)
    out = jnp.einsum("oc,bchw->bohw", weight, aug) + bias[None, :, None, None]
    return out


if __name__ == "__main__":
    key = jax.random.PRNGKey(0)
    k_x, k_w, k_b = jax.random.split(key, 3)

    # Small shapes: batch=2, in_channels=4, spatial=16x16, out_channels=64
    B, C, H, W = 2, 4, 16, 16
    O = 64
    C_aug = C + 2  # AddCoordinates appends 2 channels (with_r=False)

    x = jax.random.normal(k_x, (B, C, H, W), dtype=jnp.float32)

    # Deterministic Conv2d-style init: U(-1/sqrt(fan_in), 1/sqrt(fan_in)),
    # fan_in = (C+2) * 1 * 1 for a 1x1 kernel.
    bound = 1.0 / jnp.sqrt(jnp.float32(C_aug))
    weight = jax.random.uniform(k_w, (O, C_aug), minval=-bound, maxval=bound,
                                dtype=jnp.float32)
    bias = jax.random.uniform(k_b, (O,), minval=-bound, maxval=bound,
                              dtype=jnp.float32)

    out = coordconv_forward(x, weight, bias)
    out = jax.block_until_ready(out)

    ref = _reference(x, weight, bias)
    assert out.shape == (B, O, H, W), out.shape
    assert out.dtype == x.dtype, out.dtype
    assert jnp.allclose(out, ref, atol=1e-5, rtol=1e-5), float(
        jnp.max(jnp.abs(out - ref)))

    print("KERNEL_OK")
</pallas_src>

<mosaic_0001>
module attributes {stable_mosaic.version = 11 : i64} {
  func.func @_coordconv_kernel(%arg0: i32, %arg1: i32, %arg2: memref<2x4x256xf32, #tpu.memory_space<vmem>>, %arg3: memref<64x4xf32, #tpu.memory_space<vmem>>, %arg4: memref<64x8xf32, #tpu.memory_space<vmem>>, %arg5: memref<8x256xf32, #tpu.memory_space<vmem>>, %arg6: memref<2x64x256xf32, #tpu.memory_space<vmem>>) attributes {dimension_semantics = [#tpu.dimension_semantics<parallel>, #tpu.dimension_semantics<parallel>], iteration_bounds = array<i64: 1, 1>, scalar_prefetch = 0 : i64, scratch_operands = 0 : i64, tpu.core_type = #tpu.core_type<tc>, window_params = [{transform_indices = @transform_0, window_bounds = array<i64: 2, 4, 256>}, {pipeline_mode = #tpu.pipeline_mode<synchronous>, transform_indices = @transform_1, window_bounds = array<i64: 64, 4>}, {pipeline_mode = #tpu.pipeline_mode<synchronous>, transform_indices = @transform_2, window_bounds = array<i64: 64, 8>}, {transform_indices = @transform_3, window_bounds = array<i64: 8, 256>}, {transform_indices = @transform_4, window_bounds = array<i64: 2, 64, 256>}]} {
    %c0 = arith.constant 0 : index
    %c0_0 = arith.constant 0 : index
    %0 = vector.load %arg4[%c0, %c0_0] : memref<64x8xf32, #tpu.memory_space<vmem>>, vector<64x8xf32>
    %c0_1 = arith.constant 0 : index
    %c0_2 = arith.constant 0 : index
    %1 = vector.load %arg5[%c0_1, %c0_2] : memref<8x256xf32, #tpu.memory_space<vmem>>, vector<8x256xf32>
    %cst = arith.constant dense<0.000000e+00> : vector<64x256xf32>
    %2 = tpu.matmul %0, %1, %cst {dimension_numbers = #tpu.dot_dimension_numbers<[1], [0], [0], [1], [0, 0, 1, 1], [], []>} : vector<64x8xf32>, vector<8x256xf32>, vector<64x256xf32> -> vector<64x256xf32>
    %c0_3 = arith.constant 0 : index
    %c0_4 = arith.constant 0 : index
    %3 = vector.load %arg3[%c0_3, %c0_4] : memref<64x4xf32, #tpu.memory_space<vmem>>, vector<64x4xf32>
    %c0_5 = arith.constant 0 : index
    %c0_6 = arith.constant 0 : index
    %c0_7 = arith.constant 0 : index
    %4 = vector.load %arg2[%c0_5, %c0_6, %c0_7] : memref<2x4x256xf32, #tpu.memory_space<vmem>>, vector<1x4x256xf32>
    %5 = vector.shape_cast %4 : vector<1x4x256xf32> to vector<4x256xf32>
    %cst_8 = arith.constant dense<0.000000e+00> : vector<64x256xf32>
    %6 = tpu.matmul %3, %5, %cst_8 {dimension_numbers = #tpu.dot_dimension_numbers<[1], [0], [0], [1], [0, 0, 1, 1], [], []>} : vector<64x4xf32>, vector<4x256xf32>, vector<64x256xf32> -> vector<64x256xf32>
    %7 = arith.addf %6, %2 : vector<64x256xf32>
    %c0_9 = arith.constant 0 : index
    %c0_10 = arith.constant 0 : index
    %c0_11 = arith.constant 0 : index
    %8 = vector.load %arg6[%c0_9, %c0_10, %c0_11] : memref<2x64x256xf32, #tpu.memory_space<vmem>>, vector<1x64x256xf32>
    %9 = vector.shape_cast %8 : vector<1x64x256xf32> to vector<64x256xf32>
    %10 = vector.shape_cast %7 : vector<64x256xf32> to vector<1x64x256xf32>
    tpu.vector_store %arg6[%c0_9, %c0_10, %c0_11], %10 {strides = array<i32>} : memref<2x64x256xf32, #tpu.memory_space<vmem>>, vector<1x64x256xf32>,
    %c1 = arith.constant 1 : index
    %c0_12 = arith.constant 0 : index
    %c0_13 = arith.constant 0 : index
    %11 = vector.load %arg2[%c1, %c0_12, %c0_13] : memref<2x4x256xf32, #tpu.memory_space<vmem>>, vector<1x4x256xf32>
    %12 = vector.shape_cast %11 : vector<1x4x256xf32> to vector<4x256xf32>
    %cst_14 = arith.constant dense<0.000000e+00> : vector<64x256xf32>
    %13 = tpu.matmul %3, %12, %cst_14 {dimension_numbers = #tpu.dot_dimension_numbers<[1], [0], [0], [1], [0, 0, 1, 1], [], []>} : vector<64x4xf32>, vector<4x256xf32>, vector<64x256xf32> -> vector<64x256xf32>
    %14 = arith.addf %13, %2 : vector<64x256xf32>
    %c1_15 = arith.constant 1 : index
    %c0_16 = arith.constant 0 : index
    %c0_17 = arith.constant 0 : index
    %15 = vector.load %arg6[%c1_15, %c0_16, %c0_17] : memref<2x64x256xf32, #tpu.memory_space<vmem>>, vector<1x64x256xf32>
    %16 = vector.shape_cast %15 : vector<1x64x256xf32> to vector<64x256xf32>
    %17 = vector.shape_cast %14 : vector<64x256xf32> to vector<1x64x256xf32>
    tpu.vector_store %arg6[%c1_15, %c0_16, %c0_17], %17 {strides = array<i32>} : memref<2x64x256xf32, #tpu.memory_space<vmem>>, vector<1x64x256xf32>,
    return
  }
  func.func @transform_0(%arg0: i32, %arg1: i32) -> (i32, i32, i32) {
    %c0_i32 = arith.constant 0 : i32
    %c0_i32_0 = arith.constant 0 : i32
    return %arg1, %c0_i32, %arg0 : i32, i32, i32
  }
  func.func @transform_1(%arg0: i32, %arg1: i32) -> (i32, i32) {
    %c0_i32 = arith.constant 0 : i32
    %c0_i32_0 = arith.constant 0 : i32
    %c0_i32_1 = arith.constant 0 : i32
    return %c0_i32, %c0_i32_0 : i32, i32
  }
  func.func @transform_2(%arg0: i32, %arg1: i32) -> (i32, i32) {
    %c0_i32 = arith.constant 0 : i32
    %c0_i32_0 = arith.constant 0 : i32
    %c0_i32_1 = arith.constant 0 : i32
    return %c0_i32, %c0_i32_0 : i32, i32
  }
  func.func @transform_3(%arg0: i32, %arg1: i32) -> (i32, i32) {
    %c0_i32 = arith.constant 0 : i32
    %c0_i32_0 = arith.constant 0 : i32
    return %c0_i32, %arg0 : i32, i32
  }
  func.func @transform_4(%arg0: i32, %arg1: i32) -> (i32, i32, i32) {
    %c0_i32 = arith.constant 0 : i32
    %c0_i32_0 = arith.constant 0 : i32
    return %arg1, %c0_i32, %arg0 : i32, i32, i32
  }
}

</mosaic_0001>

<llo_original>
// kernel: tpu_custom_call.1
$region0: #{tpu_custom_call.1}
  #allocation0 [shape = 'u32[]', space=smem, size = 0x4, offset = 0x4, fixed_abs, tag = 'smem constant byte address 0x4 - core index']
  #allocation1 [shape = 'u32[144,128]{1,0:T(1,128)}', space=vmem, size = 0x12000, scoped, tag = 'internal scratch']
  %s0 = inlined_call_operand.vmem [shape: f32[2,4,256], index: 0, kind: input, shape index: {}]
  %s1 = inlined_call_operand.vmem [shape: f32[64,4], index: 1, kind: input, shape index: {}]
  %s2 = inlined_call_operand.vmem [shape: f32[64,8], index: 2, kind: input, shape index: {}]
  %s3 = inlined_call_operand.vmem [shape: f32[8,256], index: 3, kind: input, shape index: {}]
  %s4 = inlined_call_operand.hbm [shape: f32[2,64,256], index: 4, kind: output, shape index: {}]
  %s5 = sld [smem:[#allocation0]]
  $region26: #{tpu_custom_call.1} parent=0
    _
  %s7 = ssub.s32 1, %s5
  %s8 = scalar_select 0, %s7, %s5
  $region1: #{tpu_custom_call.1} parent=0
    #allocation2 [shape = 'u8[131072]{0}', space=vmem, size = 0x20000, scoped, tag = 'output window, operand 0, single buffered']
    #allocation3 [shape = 's32[1]{0}', space=sflag, size = 0x4, scoped, tag = 'scoped memory for tpu_custom_call.1']
    %9 = vsyncpa [#allocation3], 0
    // Predicated region
    $region2: #{tpu_custom_call.1} parent=1 // pred_check
      _
    $region3: #{tpu_custom_call.1} parent=1 // pred_check_branch
      %11 = sbr.rel (0) target = $region5
    $region4: #{tpu_custom_call.1} parent=1 // pred_region
      _
    $region5: #{tpu_custom_call.1} parent=1 // pred_fallthru
      _
    // Predicated region
    $region6: #{tpu_custom_call.1} parent=1 // pred_check
      _
    $region7: #{tpu_custom_call.1} parent=1 // pred_check_branch
      %13 = sbr.rel (0) target = $region9
    $region8: #{tpu_custom_call.1} parent=1 // pred_region
      _
    $region9: #{tpu_custom_call.1} parent=1 // pred_fallthru
      _
    // Predicated region
    $region10: #{tpu_custom_call.1} parent=1 // pred_check
      _
    $region11: #{tpu_custom_call.1} parent=1 // pred_check_branch
      %15 = sbr.rel (0) target = $region13
    $region12: #{tpu_custom_call.1} parent=1 // pred_region
      _
    $region13: #{tpu_custom_call.1} parent=1 // pred_fallthru
      _
    // Predicated region
    $region14: #{tpu_custom_call.1} parent=1 // pred_check
      _
    $region15: #{tpu_custom_call.1} parent=1 // pred_check_branch
      %17 = sbr.rel (0) target = $region17
    $region16: #{tpu_custom_call.1} parent=1 // pred_region
      _
    $region17: #{tpu_custom_call.1} parent=1 // pred_fallthru
      _
    %v18 = vld [vmem:[%s2] sm:$0xff]
    %v19 = vld [vmem:[%s2 + $0x8] sm:$0xff]
    %v20 = vld [vmem:[%s2 + $0x10] sm:$0xff]
    %v21 = vld [vmem:[%s2 + $0x18] sm:$0xff]
    %v22 = vld [vmem:[%s2 + $0x20] sm:$0xff]
    %v23 = vld [vmem:[%s2 + $0x28] sm:$0xff]
    %v24 = vld [vmem:[%s2 + $0x30] sm:$0xff]
    %v25 = vld [vmem:[%s2 + $0x38] sm:$0xff]
    %v26 = vld [vmem:[%s3] sm:$0xff]
    %v27 = vld [vmem:[%s3 + $0x8] sm:$0xff]
    %vm28 = vcmask 64512
    %v30 = vsel %vm28, %v18, 0
    %v33 = vsel %vm28, %v19, 0
    %v36 = vsel %vm28, %v20, 0
    %v39 = vsel %vm28, %v21, 0
    %v42 = vsel %vm28, %v22, 0
    %v45 = vsel %vm28, %v23, 0
    %v48 = vsel %vm28, %v24, 0
    %v51 = vsel %vm28, %v25, 0
    %53 = vmatprep.subr.mxu0 %v27
    %54 = vmatpush1.msra.mxu0 %v26
    %55 = vmatprep.subr.mxu0 0.0
    %56 = vmatpush1.msra.mxu0 0.0
    %57 = vmatprep.subr.mxu0 0.0
    %58 = vmatpush1.msra.mxu0 0.0
    %59 = vmatprep.subr.mxu0 0.0
    %60 = vmatpush1.msra.mxu0 0.0
    %61 = vmatprep.subr.mxu0 0.0
    %62 = vmatpush1.msra.mxu0 0.0
    %63 = vmatprep.subr.mxu0 0.0
    %64 = vmatpush1.msra.mxu0 0.0
    %65 = vmatprep.subr.mxu0 0.0
    %66 = vmatpush1.msra.mxu0 0.0
    %67 = vmatprep.subr.mxu0 0.0
    %68 = vmatpush1.msra.mxu0 0.0
    %69 = vmatprep.subr.mxu0 0.0
    %70 = vmatpush1.msra.mxu0 0.0
    %71 = vmatprep.subr.mxu0 0.0
    %72 = vmatpush1.msra.mxu0 0.0
    %73 = vmatprep.subr.mxu0 0.0
    %74 = vmatpush1.msra.mxu0 0.0
    %75 = vmatprep.subr.mxu0 0.0
    %76 = vmatpush1.msra.mxu0 0.0
    %77 = vmatprep.subr.mxu0 0.0
    %78 = vmatpush1.msra.mxu0 0.0
    %79 = vmatprep.subr.mxu0 0.0
    %80 = vmatpush1.msra.mxu0 0.0
    %81 = vmatprep.subr.mxu0 0.0
    %82 = vmatpush1.msra.mxu0 0.0
    %83 = vmatprep.subr.mxu0 0.0
    %84 = vmatpush1.msra.mxu0 0.0
    %85 = vmatprep.subr.mxu0 0.0
    %86 = vmatpush1.msra.mxu0 0.0
    %87 = vmatprep.subr.mxu0 0.0
    %88 = vmatpush1.msra.mxu0 0.0
    %89 = vmatprep.subr.mxu0 0.0
    %90 = vmatpush1.msra.mxu0 0.0
    %91 = vmatprep.subr.mxu0 0.0
    %92 = vmatpush1.msra.mxu0 0.0
    %93 = vmatprep.subr.mxu0 0.0
    %94 = vmatpush1.msra.mxu0 0.0
    %95 = vmatprep.subr.mxu0 0.0
    %96 = vmatpush1.msra.mxu0 0.0
    %97 = vmatprep.subr.mxu0 0.0
    %98 = vmatpush1.msra.mxu0 0.0
    %99 = vmatprep.subr.mxu0 0.0
    %100 = vmatpush1.msra.mxu0 0.0
    %101 = vmatprep.subr.mxu0 0.0
    %102 = vmatpush1.msra.mxu0 0.0
    %103 = vmatprep.subr.mxu0 0.0
    %104 = vmatpush1.msra.mxu0 0.0
    %105 = vmatprep.subr.mxu0 0.0
    %106 = vmatpush1.msra.mxu0 0.0
    %107 = vmatprep.subr.mxu0 0.0
    %108 = vmatpush1.msra.mxu0 0.0
    %109 = vmatprep.subr.mxu0 0.0
    %110 = vmatpush1.msra.mxu0 0.0
    %111 = vmatprep.subr.mxu0 0.0
    %112 = vmatpush1.msra.mxu0 0.0
    %113 = vmatprep.subr.mxu0 0.0
    %114 = vmatpush1.msra.mxu0 0.0
    %115 = vmatprep.subr.mxu0 0.0
    %116 = vmatpush1.msra.mxu0 0.0
    %117 = vmatprep.mubr.f32.mxu0 0.0
    %118 = vmatmul.mubr.f32.gmra.mrb[0].mxu0 %v30
    %v119 = vpop.f32.mrb[0].mxu0
    %v120 = vadd.f32 0.0, %v119
    %v121 = vpop.f32.mrb[0].mxu0
    %v122 = vadd.f32 0.0, %v121
    %123 = vmatprep.mubr.f32.mxu0 0.0
    %124 = vmatmul.mubr.f32.gmra.mrb[0].mxu0 %v33
    %v125 = vpop.f32.mrb[0].mxu0
    %v126 = vadd.f32 0.0, %v125
    %v127 = vpop.f32.mrb[0].mxu0
    %v128 = vadd.f32 0.0, %v127
    %129 = vmatprep.mubr.f32.mxu0 0.0
    %130 = vmatmul.mubr.f32.gmra.mrb[0].mxu0 %v36
    %v131 = vpop.f32.mrb[0].mxu0
    %v132 = vadd.f32 0.0, %v131
    %v133 = vpop.f32.mrb[0].mxu0
    %v134 = vadd.f32 0.0, %v133
    %135 = vmatprep.mubr.f32.mxu0 0.0
    %136 = vmatmul.mubr.f32.gmra.mrb[0].mxu0 %v39
    %v137 = vpop.f32.mrb[0].mxu0
    %v138 = vadd.f32 0.0, %v137
    %v139 = vpop.f32.mrb[0].mxu0
    %v140 = vadd.f32 0.0, %v139
    %141 = vmatprep.mubr.f32.mxu0 0.0
    %142 = vmatmul.mubr.f32.gmra.mrb[0].mxu0 %v42
    %v143 = vpop.f32.mrb[0].mxu0
    %v144 = vadd.f32 0.0, %v143
    %v145 = vpop.f32.mrb[0].mxu0
    %v146 = vadd.f32 0.0, %v145
    %147 = vmatprep.mubr.f32.mxu0 0.0
    %148 = vmatmul.mubr.f32.gmra.mrb[0].mxu0 %v45
    %v149 = vpop.f32.mrb[0].mxu0
    %v150 = vadd.f32 0.0, %v149
    %v151 = vpop.f32.mrb[0].mxu0
    %v152 = vadd.f32 0.0, %v151
    %153 = vmatprep.mubr.f32.mxu0 0.0
    %154 = vmatmul.mubr.f32.gmra.mrb[0].mxu0 %v48
    %v155 = vpop.f32.mrb[0].mxu0
    %v156 = vadd.f32 0.0, %v155
    %v157 = vpop.f32.mrb[0].mxu0
    %v158 = vadd.f32 0.0, %v157
    %159 = vmatprep.mubr.f32.mxu0 0.0
    %160 = vmatmul.mubr.f32.gmra.mrb[0].mxu0 %v51
    %v161 = vpop.f32.mrb[0].mxu0
    %v162 = vadd.f32 0.0, %v161
    %v163 = vpop.f32.mrb[0].mxu0
    %v164 = vadd.f32 0.0, %v163
    %165 = vdwg.mxu0
    %v166 = vld [vmem:[%s1] sm:$0xff]
    %v167 = vld [vmem:[%s1 + $0x8] sm:$0xff]
    %v168 = vld [vmem:[%s1 + $0x10] sm:$0xff]
    %v169 = vld [vmem:[%s1 + $0x18] sm:$0xff]
    %v170 = vld [vmem:[%s1 + $0x20] sm:$0xff]
    %v171 = vld [vmem:[%s1 + $0x28] sm:$0xff]
    %v172 = vld [vmem:[%s1 + $0x30] sm:$0xff]
    %v173 = vld [vmem:[%s1 + $0x38] sm:$0xff]
    %v174 = vld [vmem:[%s0] sm:$0xff]
    %v176 = vcombine.high %v174, %v174
    %vm177 = vcmask 31744
    %v179 = vsel %vm177, %v166, 0
    %v182 = vsel %vm177, %v167, 0
    %v185 = vsel %vm177, %v168, 0
    %v188 = vsel %vm177, %v169, 0
    %v191 = vsel %vm177, %v170, 0
    %v194 = vsel %vm177, %v171, 0
    %v197 = vsel %vm177, %v172, 0
    %v200 = vsel %vm177, %v173, 0
    %vm202 = vcmask 1043456
    %v203 = vsel %vm202, %v174, 0
    %v205 = vsel %vm202, %v176, 0
    %207 = vmatprep.subr.mxu0 %v205
    %208 = vmatpush1.msra.mxu0 %v203
    %209 = vmatprep.subr.mxu0 0.0
    %210 = vmatpush1.msra.mxu0 0.0
    %211 = vmatprep.subr.mxu0 0.0
    %212 = vmatpush1.msra.mxu0 0.0
    %213 = vmatprep.subr.mxu0 0.0
    %214 = vmatpush1.msra.mxu0 0.0
    %215 = vmatprep.subr.mxu0 0.0
    %216 = vmatpush1.msra.mxu0 0.0
    %217 = vmatprep.subr.mxu0 0.0
    %218 = vmatpush1.msra.mxu0 0.0
    %219 = vmatprep.subr.mxu0 0.0
    %220 = vmatpush1.msra.mxu0 0.0
    %221 = vmatprep.subr.mxu0 0.0
    %222 = vmatpush1.msra.mxu0 0.0
    %223 = vmatprep.subr.mxu0 0.0
    %224 = vmatpush1.msra.mxu0 0.0
    %225 = vmatprep.subr.mxu0 0.0
    %226 = vmatpush1.msra.mxu0 0.0
    %227 = vmatprep.subr.mxu0 0.0
    %228 = vmatpush1.msra.mxu0 0.0
    %229 = vmatprep.subr.mxu0 0.0
    %230 = vmatpush1.msra.mxu0 0.0
    %231 = vmatprep.subr.mxu0 0.0
    %232 = vmatpush1.msra.mxu0 0.0
    %233 = vmatprep.subr.mxu0 0.0
    %234 = vmatpush1.msra.mxu0 0.0
    %235 = vmatprep.subr.mxu0 0.0
    %236 = vmatpush1.msra.mxu0 0.0
    %237 = vmatprep.subr.mxu0 0.0
    %238 = vmatpush1.msra.mxu0 0.0
    %239 = vmatprep.subr.mxu0 0.0
    %240 = vmatpush1.msra.mxu0 0.0
    %241 = vmatprep.subr.mxu0 0.0
    %242 = vmatpush1.msra.mxu0 0.0
    %243 = vmatprep.subr.mxu0 0.0
    %244 = vmatpush1.msra.mxu0 0.0
    %245 = vmatprep.subr.mxu0 0.0
    %246 = vmatpush1.msra.mxu0 0.0
    %247 = vmatprep.subr.mxu0 0.0
    %248 = vmatpush1.msra.mxu0 0.0
    %249 = vmatprep.subr.mxu0 0.0
    %250 = vmatpush1.msra.mxu0 0.0
    %251 = vmatprep.subr.mxu0 0.0
    %252 = vmatpush1.msra.mxu0 0.0
    %253 = vmatprep.subr.mxu0 0.0
    %254 = vmatpush1.msra.mxu0 0.0
    %255 = vmatprep.subr.mxu0 0.0
    %256 = vmatpush1.msra.mxu0 0.0
    %257 = vmatprep.subr.mxu0 0.0
    %258 = vmatpush1.msra.mxu0 0.0
    %259 = vmatprep.subr.mxu0 0.0
    %260 = vmatpush1.msra.mxu0 0.0
    %261 = vmatprep.subr.mxu0 0.0
    %262 = vmatpush1.msra.mxu0 0.0
    %263 = vmatprep.subr.mxu0 0.0
    %264 = vmatpush1.msra.mxu0 0.0
    %265 = vmatprep.subr.mxu0 0.0
    %266 = vmatpush1.msra.mxu0 0.0
    %267 = vmatprep.subr.mxu0 0.0
    %268 = vmatpush1.msra.mxu0 0.0
    %269 = vmatprep.subr.mxu0 0.0
    %270 = vmatpush1.msra.mxu0 0.0
    %271 = vmatprep.mubr.f32.mxu0 0.0
    %272 = vmatmul.mubr.f32.gmra.mrb[0].mxu0 %v179
    %v273 = vpop.f32.mrb[0].mxu0
    %v274 = vadd.f32 %v120, %v273
    %v275 = vpop.f32.mrb[0].mxu0
    %v276 = vadd.f32 %v122, %v275
    %277 = vmatprep.mubr.f32.mxu0 0.0
    %278 = vmatmul.mubr.f32.gmra.mrb[0].mxu0 %v182
    %v279 = vpop.f32.mrb[0].mxu0
    %v280 = vadd.f32 %v126, %v279
    %v281 = vpop.f32.mrb[0].mxu0
    %v282 = vadd.f32 %v128, %v281
    %283 = vmatprep.mubr.f32.mxu0 0.0
    %284 = vmatmul.mubr.f32.gmra.mrb[0].mxu0 %v185
    %v285 = vpop.f32.mrb[0].mxu0
    %v286 = vadd.f32 %v132, %v285
    %v287 = vpop.f32.mrb[0].mxu0
    %v288 = vadd.f32 %v134, %v287
    %289 = vmatprep.mubr.f32.mxu0 0.0
    %290 = vmatmul.mubr.f32.gmra.mrb[0].mxu0 %v188
    %v291 = vpop.f32.mrb[0].mxu0
    %v292 = vadd.f32 %v138, %v291
    %v293 = vpop.f32.mrb[0].mxu0
    %v294 = vadd.f32 %v140, %v293
    %295 = vmatprep.mubr.f32.mxu0 0.0
    %296 = vmatmul.mubr.f32.gmra.mrb[0].mxu0 %v191
    %v297 = vpop.f32.mrb[0].mxu0
    %v298 = vadd.f32 %v144, %v297
    %v299 = vpop.f32.mrb[0].mxu0
    %v300 = vadd.f32 %v146, %v299
    %301 = vmatprep.mubr.f32.mxu0 0.0
    %302 = vmatmul.mubr.f32.gmra.mrb[0].mxu0 %v194
    %v303 = vpop.f32.mrb[0].mxu0
    %v304 = vadd.f32 %v150, %v303
    %v305 = vpop.f32.mrb[0].mxu0
    %v306 = vadd.f32 %v152, %v305
    %307 = vmatprep.mubr.f32.mxu0 0.0
    %308 = vmatmul.mubr.f32.gmra.mrb[0].mxu0 %v197
    %v309 = vpop.f32.mrb[0].mxu0
    %v310 = vadd.f32 %v156, %v309
    %v311 = vpop.f32.mrb[0].mxu0
    %v312 = vadd.f32 %v158, %v311
    %313 = vmatprep.mubr.f32.mxu0 0.0
    %314 = vmatmul.mubr.f32.gmra.mrb[0].mxu0 %v200
    %v315 = vpop.f32.mrb[0].mxu0
    %v316 = vadd.f32 %v162, %v315
    %v317 = vpop.f32.mrb[0].mxu0
    %v318 = vadd.f32 %v164, %v317
    %319 = vdwg.mxu0
    %320 = vst [vmem:[#allocation2] sm:$0xff] %v274
    %321 = vst [vmem:[#allocation2 + $0x8] sm:$0xff] %v276
    %322 = vst [vmem:[#allocation2 + $0x10] sm:$0xff] %v280
    %323 = vst [vmem:[#allocation2 + $0x18] sm:$0xff] %v282
    %324 = vst [vmem:[#allocation2 + $0x20] sm:$0xff] %v286
    %325 = vst [vmem:[#allocation2 + $0x28] sm:$0xff] %v288
    %326 = vst [vmem:[#allocation2 + $0x30] sm:$0xff] %v292
    %327 = vst [vmem:[#allocation2 + $0x38] sm:$0xff] %v294
    %328 = vst [vmem:[#allocation2 + $0x40] sm:$0xff] %v298
    %329 = vst [vmem:[#allocation2 + $0x48] sm:$0xff] %v300
    %330 = vst [vmem:[#allocation2 + $0x50] sm:$0xff] %v304
    %331 = vst [vmem:[#allocation2 + $0x58] sm:$0xff] %v306
    %332 = vst [vmem:[#allocation2 + $0x60] sm:$0xff] %v310
    %333 = vst [vmem:[#allocation2 + $0x68] sm:$0xff] %v312
    %334 = vst [vmem:[#allocation2 + $0x70] sm:$0xff] %v316
    %335 = vst [vmem:[#allocation2 + $0x78] sm:$0xff] %v318
    %s336 = scalar_lea.vmem %s0, 8
    %v337 = vld [vmem:[%s336] sm:$0xff]
    %v339 = vcombine.high %v337, %v337
    %v340 = vsel %vm202, %v337, 0
    %v342 = vsel %vm202, %v339, 0
    %344 = vmatprep.subr.mxu0 %v342
    %345 = vmatpush1.msra.mxu0 %v340
    %346 = vmatprep.subr.mxu0 0.0
    %347 = vmatpush1.msra.mxu0 0.0
    %348 = vmatprep.subr.mxu0 0.0
    %349 = vmatpush1.msra.mxu0 0.0
    %350 = vmatprep.subr.mxu0 0.0
    %351 = vmatpush1.msra.mxu0 0.0
    %352 = vmatprep.subr.mxu0 0.0
    %353 = vmatpush1.msra.mxu0 0.0
    %354 = vmatprep.subr.mxu0 0.0
    %355 = vmatpush1.msra.mxu0 0.0
    %356 = vmatprep.subr.mxu0 0.0
    %357 = vmatpush1.msra.mxu0 0.0
    %358 = vmatprep.subr.mxu0 0.0
    %359 = vmatpush1.msra.mxu0 0.0
    %360 = vmatprep.subr.mxu0 0.0
    %361 = vmatpush1.msra.mxu0 0.0
    %362 = vmatprep.subr.mxu0 0.0
    %363 = vmatpush1.msra.mxu0 0.0
    %364 = vmatprep.subr.mxu0 0.0
    %365 = vmatpush1.msra.mxu0 0.0
    %366 = vmatprep.subr.mxu0 0.0
    %367 = vmatpush1.msra.mxu0 0.0
    %368 = vmatprep.subr.mxu0 0.0
    %369 = vmatpush1.msra.mxu0 0.0
    %370 = vmatprep.subr.mxu0 0.0
    %371 = vmatpush1.msra.mxu0 0.0
    %372 = vmatprep.subr.mxu0 0.0
    %373 = vmatpush1.msra.mxu0 0.0
    %374 = vmatprep.subr.mxu0 0.0
    %375 = vmatpush1.msra.mxu0 0.0
    %376 = vmatprep.subr.mxu0 0.0
    %377 = vmatpush1.msra.mxu0 0.0
    %378 = vmatprep.subr.mxu0 0.0
    %379 = vmatpush1.msra.mxu0 0.0
    %380 = vmatprep.subr.mxu0 0.0
    %381 = vmatpush1.msra.mxu0 0.0
    %382 = vmatprep.subr.mxu0 0.0
    %383 = vmatpush1.msra.mxu0 0.0
    %384 = vmatprep.subr.mxu0 0.0
    %385 = vmatpush1.msra.mxu0 0.0
    %386 = vmatprep.subr.mxu0 0.0
    %387 = vmatpush1.msra.mxu0 0.0
    %388 = vmatprep.subr.mxu0 0.0
    %389 = vmatpush1.msra.mxu0 0.0
    %390 = vmatprep.subr.mxu0 0.0
    %391 = vmatpush1.msra.mxu0 0.0
    %392 = vmatprep.subr.mxu0 0.0
    %393 = vmatpush1.msra.mxu0 0.0
    %394 = vmatprep.subr.mxu0 0.0
    %395 = vmatpush1.msra.mxu0 0.0
    %396 = vmatprep.subr.mxu0 0.0
    %397 = vmatpush1.msra.mxu0 0.0
    %398 = vmatprep.subr.mxu0 0.0
    %399 = vmatpush1.msra.mxu0 0.0
    %400 = vmatprep.subr.mxu0 0.0
    %401 = vmatpush1.msra.mxu0 0.0
    %402 = vmatprep.subr.mxu0 0.0
    %403 = vmatpush1.msra.mxu0 0.0
    %404 = vmatprep.subr.mxu0 0.0
    %405 = vmatpush1.msra.mxu0 0.0
    %406 = vmatprep.subr.mxu0 0.0
    %407 = vmatpush1.msra.mxu0 0.0
    %408 = vmatprep.mubr.f32.mxu0 0.0
    %409 = vmatmul.mubr.f32.gmra.mrb[0].mxu0 %v179
    %v410 = vpop.f32.mrb[0].mxu0
    %v411 = vadd.f32 %v120, %v410
    %v412 = vpop.f32.mrb[0].mxu0
    %v413 = vadd.f32 %v122, %v412
    %414 = vmatprep.mubr.f32.mxu0 0.0
    %415 = vmatmul.mubr.f32.gmra.mrb[0].mxu0 %v182
    %v416 = vpop.f32.mrb[0].mxu0
    %v417 = vadd.f32 %v126, %v416
    %v418 = vpop.f32.mrb[0].mxu0
    %v419 = vadd.f32 %v128, %v418
    %420 = vmatprep.mubr.f32.mxu0 0.0
    %421 = vmatmul.mubr.f32.gmra.mrb[0].mxu0 %v185
    %v422 = vpop.f32.mrb[0].mxu0
    %v423 = vadd.f32 %v132, %v422
    %v424 = vpop.f32.mrb[0].mxu0
    %v425 = vadd.f32 %v134, %v424
    %426 = vmatprep.mubr.f32.mxu0 0.0
    %427 = vmatmul.mubr.f32.gmra.mrb[0].mxu0 %v188
    %v428 = vpop.f32.mrb[0].mxu0
    %v429 = vadd.f32 %v138, %v428
    %v430 = vpop.f32.mrb[0].mxu0
    %v431 = vadd.f32 %v140, %v430
    %432 = vmatprep.mubr.f32.mxu0 0.0
    %433 = vmatmul.mubr.f32.gmra.mrb[0].mxu0 %v191
    %v434 = vpop.f32.mrb[0].mxu0
    %v435 = vadd.f32 %v144, %v434
    %v436 = vpop.f32.mrb[0].mxu0
    %v437 = vadd.f32 %v146, %v436
    %438 = vmatprep.mubr.f32.mxu0 0.0
    %439 = vmatmul.mubr.f32.gmra.mrb[0].mxu0 %v194
    %v440 = vpop.f32.mrb[0].mxu0
    %v441 = vadd.f32 %v150, %v440
    %v442 = vpop.f32.mrb[0].mxu0
    %v443 = vadd.f32 %v152, %v442
    %444 = vmatprep.mubr.f32.mxu0 0.0
    %445 = vmatmul.mubr.f32.gmra.mrb[0].mxu0 %v197
    %v446 = vpop.f32.mrb[0].mxu0
    %v447 = vadd.f32 %v156, %v446
    %v448 = vpop.f32.mrb[0].mxu0
    %v449 = vadd.f32 %v158, %v448
    %450 = vmatprep.mubr.f32.mxu0 0.0
    %451 = vmatmul.mubr.f32.gmra.mrb[0].mxu0 %v200
    %v452 = vpop.f32.mrb[0].mxu0
    %v453 = vadd.f32 %v162, %v452
    %v454 = vpop.f32.mrb[0].mxu0
    %v455 = vadd.f32 %v164, %v454
    %456 = vdwg.mxu0
    %s457 = scalar_lea.vmem [#allocation2], 128
    %458 = vst [vmem:[%s457] sm:$0xff] %v411
    %459 = vst [vmem:[%s457 + $0x8] sm:$0xff] %v413
    %460 = vst [vmem:[%s457 + $0x10] sm:$0xff] %v417
    %461 = vst [vmem:[%s457 + $0x18] sm:$0xff] %v419
    %462 = vst [vmem:[%s457 + $0x20] sm:$0xff] %v423
    %463 = vst [vmem:[%s457 + $0x28] sm:$0xff] %v425
    %464 = vst [vmem:[%s457 + $0x30] sm:$0xff] %v429
    %465 = vst [vmem:[%s457 + $0x38] sm:$0xff] %v431
    %466 = vst [vmem:[%s457 + $0x40] sm:$0xff] %v435
    %467 = vst [vmem:[%s457 + $0x48] sm:$0xff] %v437
    %468 = vst [vmem:[%s457 + $0x50] sm:$0xff] %v441
    %469 = vst [vmem:[%s457 + $0x58] sm:$0xff] %v443
    %470 = vst [vmem:[%s457 + $0x60] sm:$0xff] %v447
    %471 = vst [vmem:[%s457 + $0x68] sm:$0xff] %v449
    %472 = vst [vmem:[%s457 + $0x70] sm:$0xff] %v453
    %473 = vst [vmem:[%s457 + $0x78] sm:$0xff] %v455
    // Predicated region
    $region18: #{tpu_custom_call.1} parent=1 // pred_check
      _
    $region19: #{tpu_custom_call.1} parent=1 // pred_check_branch
      %475 = sbr.rel (0) target = $region21
    $region20: #{tpu_custom_call.1} parent=1 // pred_region
      %s477 = ssub.s32 4096, 4096
      %478 = vsyncadd [#allocation3], %s477
      %s479 = sshll.u32 [#allocation2], 4
      %s480 = int_to_ptr.vmem [resolvable:$true] %s479
      %485 = dma.vmem_to_hbm [thread:$0]  %s480, 4096, %s4, [#allocation3], 256, 256, 16
    $region21: #{tpu_custom_call.1} parent=1 // pred_fallthru
      _
    // Predicated region
    $region22: #{tpu_custom_call.1} parent=1 // pred_check
      _
    $region23: #{tpu_custom_call.1} parent=1 // pred_check_branch
      %487 = sbr.rel (0) target = $region25
    $region24: #{tpu_custom_call.1} parent=1 // pred_region
      %488 = dma.done [#allocation3], 4096
    $region25: #{tpu_custom_call.1} parent=1 // pred_fallthru
      _
    %489 = vsyncpa [#allocation3], 1

</llo_original>
